<compile_context>
chip_gen: v5e
topology: v5e:2x2
jax: 0.10.0
libtpu: 0.0.40
codegen_flags: <defaults>
</compile_context>

<pallas_src>
import jax
import jax.numpy as jnp
from jax.experimental import pallas as pl
from jax.experimental.pallas import tpu as pltpu


def _round_up(a, b):
    return (a + b - 1) // b * b


def conv_relu_stats_kernel(p_ref, w_ref, a_ref, s_ref):
    """One row-tile: conv (+folded bias) + ReLU, plus BN partial sums.

    p_ref: (T_NH, W*Kaug)    im2col patches, W pixels packed along lanes
    w_ref: (W*Kaug, W*Cout)  block-diagonal weights (bias folded as last row
                             of each diagonal block)
    a_ref: (T_NH, W*Cout)    pre-BN activation, lane-dense packed layout (f32)
    s_ref: (1, 2, W*Cout)    per-tile [sum, sum of squares] over rows
    """
    acc = jnp.dot(p_ref[...], w_ref[...], preferred_element_type=jnp.float32)
    acc = jnp.maximum(acc, 0.0)                       # ReLU, lane-dense
    a_ref[...] = acc.astype(a_ref.dtype)
    ssum = jnp.sum(acc, axis=0, keepdims=True)        # (1, W*Cout)
    ssq = jnp.sum(acc * acc, axis=0, keepdims=True)   # (1, W*Cout)
    s_ref[0] = jnp.concatenate([ssum, ssq], axis=0)   # (2, W*Cout)


def bn_apply_kernel(a_ref, scale_ref, shift_ref, o_ref):
    """y = a * scale + shift, fully lane-dense (per-channel scale tiled over W)."""
    o_ref[...] = (a_ref[...] * scale_ref[...] + shift_ref[...]).astype(o_ref.dtype)


def cnn_block_v2(x_nchw, weight, bias, gamma, beta, *, padding=1, eps=1e-5,
                 compute_dtype=jnp.float32, tile_nh=None):
    """x_nchw: (N, Cin, H, W); weight: (Cout, Cin, KH, KW) (PyTorch layouts).

    On v6e/v7x pass compute_dtype=jnp.bfloat16 to halve matmul-input HBM
    traffic (accumulation stays f32); v5e should keep the f32 default.
    """
    N, Cin, H, W = x_nchw.shape
    Cout, _, KH, KW = weight.shape
    Hout = H + 2 * padding - (KH - 1)       # stride 1, dilation 1
    Wout = W + 2 * padding - (KW - 1)
    Kaug = KH * KW * Cin + 1                # +1 = folded conv bias column
    NH = N * Hout
    WC = Wout * Cout
    WK = Wout * Kaug

    # ---- XLA glue: layout + im2col (patch construction done in the wrapper) ----
    x_nhwc = jnp.transpose(x_nchw, (0, 2, 3, 1)).astype(compute_dtype)
    x_pad = jnp.pad(x_nhwc, ((0, 0), (padding, padding), (padding, padding), (0, 0)))
    taps = [x_pad[:, kh:kh + Hout, kw:kw + Wout, :]
            for kh in range(KH) for kw in range(KW)]
    taps.append(jnp.ones((N, Hout, Wout, 1), compute_dtype))       # bias column
    patches = jnp.concatenate(taps, axis=-1).reshape(NH, WK)       # (N*Hout, Wout*Kaug)

    w_aug = jnp.concatenate(
        [jnp.transpose(weight, (2, 3, 1, 0)).reshape(KH * KW * Cin, Cout),
         bias.reshape(1, Cout)], axis=0).astype(compute_dtype)      # (Kaug, Cout)
    # Block-diagonal expansion: the matmul output is directly (row, W*Cout).
    w_bd = jnp.kron(jnp.eye(Wout, dtype=compute_dtype), w_aug)      # (W*Kaug, W*Cout)

    # ---- tiling over image rows (N*Hout) ----
    if tile_nh is None:
        tile_nh = max(8, (max(1, 256 // max(Wout, 1)) // 8) * 8)    # ~256 pixel rows/tile
    tile_nh = min(tile_nh, _round_up(NH, 8))
    NH_pad = _round_up(NH, tile_nh)
    num_tiles = NH_pad // tile_nh
    if NH_pad > NH:
        # Padded rows are all-zero patches (incl. zero bias column) -> activation 0
        # -> contribute exactly 0 to the BN sums; sliced off at the end.
        patches = jnp.pad(patches, ((0, NH_pad - NH), (0, 0)))

    cparams = pltpu.CompilerParams(
        dimension_semantics=("parallel",),
        vmem_limit_bytes=32 * 1024 * 1024)

    # ---- pass 1: conv + bias + ReLU, per-tile BN partial stats ----
    act, stats = pl.pallas_call(
        conv_relu_stats_kernel,
        grid=(num_tiles,),
        in_specs=[
            pl.BlockSpec((tile_nh, WK), lambda t: (t, 0)),
            pl.BlockSpec((WK, WC), lambda t: (0, 0)),
        ],
        out_specs=(
            pl.BlockSpec((tile_nh, WC), lambda t: (t, 0)),
            pl.BlockSpec((1, 2, WC), lambda t: (t, 0, 0)),
        ),
        out_shape=(
            jax.ShapeDtypeStruct((NH_pad, WC), jnp.float32),
            jax.ShapeDtypeStruct((num_tiles, 2, WC), jnp.float32),
        ),
        compiler_params=cparams,
    )(patches, w_bd)

    # ---- fold partial stats into per-channel scale/shift (tiny XLA math) ----
    totals = stats.sum(axis=0).reshape(2, Wout, Cout).sum(axis=1)   # (2, Cout)
    count = float(N * Hout * Wout)
    mean = totals[0] / count
    var = jnp.maximum(totals[1] / count - mean * mean, 0.0)         # biased (training-mode BN)
    inv = jax.lax.rsqrt(var + eps)
    scale = gamma.astype(jnp.float32) * inv
    shift = beta.astype(jnp.float32) - mean * scale
    scale_row = jnp.tile(scale, Wout)[None, :]                       # (1, W*Cout)
    shift_row = jnp.tile(shift, Wout)[None, :]

    # ---- pass 2: normalize (lane-dense affine) ----
    out_packed = pl.pallas_call(
        bn_apply_kernel,
        grid=(num_tiles,),
        in_specs=[
            pl.BlockSpec((tile_nh, WC), lambda t: (t, 0)),
            pl.BlockSpec((1, WC), lambda t: (0, 0)),
            pl.BlockSpec((1, WC), lambda t: (0, 0)),
        ],
        out_specs=pl.BlockSpec((tile_nh, WC), lambda t: (t, 0)),
        out_shape=jax.ShapeDtypeStruct((NH_pad, WC), x_nchw.dtype),
        compiler_params=cparams,
    )(act, scale_row, shift_row)

    y = out_packed[:NH].reshape(N, Hout, Wout, Cout)
    return jnp.transpose(y, (0, 3, 1, 2))                            # back to NCHW

    # TODO(synk): kernel_size==5 branch (two stacked 3x3 convs), Dropout2d path,
    # and BatchNorm running-stat updates are not implemented (default config
    # does not use them).


if __name__ == "__main__":
    # Small deterministic example consistent with the module's forward:
    # batch=2, in_channels=4, out_channels=8, spatial=16x16.
    N, Cin, Cout, H, W = 2, 4, 8, 16, 16
    KH = KW = 3

    key = jax.random.PRNGKey(0)
    kx, kw, kb = jax.random.split(key, 3)
    x = jax.random.normal(kx, (N, Cin, H, W), dtype=jnp.float32)

    fan_in = Cin * KH * KW
    bound = 1.0 / (fan_in ** 0.5)
    weight = jax.random.uniform(kw, (Cout, Cin, KH, KW), jnp.float32, -bound, bound)
    bias = jax.random.uniform(kb, (Cout,), jnp.float32, -bound, bound)
    gamma = jnp.ones((Cout,), jnp.float32)   # BatchNorm2d weight init
    beta = jnp.zeros((Cout,), jnp.float32)   # BatchNorm2d bias init

    out = cnn_block_v2(x, weight, bias, gamma, beta, padding=1)
    out = jax.block_until_ready(out)
    assert out.shape == (N, Cout, H, W)

    # Pure-JAX reference (same training-mode BN semantics) for a sanity check.
    ref = jax.lax.conv_general_dilated(
        x, weight, window_strides=(1, 1), padding=((1, 1), (1, 1)),
        dimension_numbers=("NCHW", "OIHW", "NCHW"))
    ref = jnp.maximum(ref + bias.reshape(1, -1, 1, 1), 0.0)
    m = ref.mean(axis=(0, 2, 3), keepdims=True)
    v = ((ref - m) ** 2).mean(axis=(0, 2, 3), keepdims=True)
    ref = ((ref - m) * jax.lax.rsqrt(v + 1e-5) * gamma.reshape(1, -1, 1, 1)
           + beta.reshape(1, -1, 1, 1))
    max_err = float(jnp.max(jnp.abs(out - ref)))
    assert jnp.allclose(out, ref, atol=2e-2, rtol=2e-2), max_err

    print("KERNEL_OK")
</pallas_src>

<mosaic_0001>
module attributes {stable_mosaic.version = 11 : i64} {
  func.func @conv_relu_stats_kernel(%arg0: i32, %arg1: memref<16x592xf32, #tpu.memory_space<vmem>>, %arg2: memref<592x128xf32, #tpu.memory_space<vmem>>, %arg3: memref<16x128xf32, #tpu.memory_space<vmem>>, %arg4: memref<1x2x128xf32, #tpu.memory_space<vmem>>) attributes {dimension_semantics = [#tpu.dimension_semantics<parallel>], iteration_bounds = array<i64: 2>, scalar_prefetch = 0 : i64, scratch_operands = 0 : i64, tpu.core_type = #tpu.core_type<tc>, window_params = [{transform_indices = @transform_0, window_bounds = array<i64: 16, 592>}, {pipeline_mode = #tpu.pipeline_mode<synchronous>, transform_indices = @transform_1, window_bounds = array<i64: 592, 128>}, {transform_indices = @transform_2, window_bounds = array<i64: 16, 128>}, {transform_indices = @transform_3, window_bounds = array<i64: 1, 2, 128>}]} {
    %c0 = arith.constant 0 : index
    %c0_0 = arith.constant 0 : index
    %0 = vector.load %arg1[%c0, %c0_0] : memref<16x592xf32, #tpu.memory_space<vmem>>, vector<16x592xf32>
    %c0_1 = arith.constant 0 : index
    %c0_2 = arith.constant 0 : index
    %1 = vector.load %arg2[%c0_1, %c0_2] : memref<592x128xf32, #tpu.memory_space<vmem>>, vector<592x128xf32>
    %cst = arith.constant dense<0.000000e+00> : vector<16x128xf32>
    %2 = tpu.matmul %0, %1, %cst {dimension_numbers = #tpu.dot_dimension_numbers<[1], [0], [0], [1], [0, 0, 1, 1], [], []>} : vector<16x592xf32>, vector<592x128xf32>, vector<16x128xf32> -> vector<16x128xf32>
    %cst_3 = arith.constant 0.000000e+00 : f32
    %3 = vector.broadcast %cst_3 : f32 to vector<16x128xf32>
    %4 = arith.maximumf %2, %3 : vector<16x128xf32>
    %c0_4 = arith.constant 0 : index
    %c0_5 = arith.constant 0 : index
    %5 = vector.load %arg3[%c0_4, %c0_5] : memref<16x128xf32, #tpu.memory_space<vmem>>, vector<16x128xf32>
    tpu.vector_store %arg3[%c0_4, %c0_5], %4 {strides = array<i32>} : memref<16x128xf32, #tpu.memory_space<vmem>>, vector<16x128xf32>,
    %cst_6 = arith.constant dense<0.000000e+00> : vector<128xf32>
    %6 = vector.multi_reduction <add>, %4, %cst_6 [0] : vector<16x128xf32> to vector<128xf32>
    %7 = vector.shape_cast %6 : vector<128xf32> to vector<1x128xf32>
    %8 = arith.mulf %4, %4 : vector<16x128xf32>
    %cst_7 = arith.constant dense<0.000000e+00> : vector<128xf32>
    %9 = vector.multi_reduction <add>, %8, %cst_7 [0] : vector<16x128xf32> to vector<128xf32>
    %10 = vector.shape_cast %9 : vector<128xf32> to vector<1x128xf32>
    %11 = tpu.concatenate %7, %10 in 0 : vector<1x128xf32>, vector<1x128xf32> -> vector<2x128xf32>
    %c0_8 = arith.constant 0 : index
    %c0_9 = arith.constant 0 : index
    %c0_10 = arith.constant 0 : index
    %12 = vector.load %arg4[%c0_8, %c0_9, %c0_10] : memref<1x2x128xf32, #tpu.memory_space<vmem>>, vector<1x2x128xf32>
    %13 = vector.shape_cast %12 : vector<1x2x128xf32> to vector<2x128xf32>
    %14 = vector.shape_cast %11 : vector<2x128xf32> to vector<1x2x128xf32>
    tpu.vector_store %arg4[%c0_8, %c0_9, %c0_10], %14 {strides = array<i32>} : memref<1x2x128xf32, #tpu.memory_space<vmem>>, vector<1x2x128xf32>,
    return
  }
  func.func @transform_0(%arg0: i32) -> (i32, i32) {
    %c0_i32 = arith.constant 0 : i32
    %c0_i32_0 = arith.constant 0 : i32
    return %arg0, %c0_i32 : i32, i32
  }
  func.func @transform_1(%arg0: i32) -> (i32, i32) {
    %c0_i32 = arith.constant 0 : i32
    %c0_i32_0 = arith.constant 0 : i32
    %c0_i32_1 = arith.constant 0 : i32
    return %c0_i32, %c0_i32_0 : i32, i32
  }
  func.func @transform_2(%arg0: i32) -> (i32, i32) {
    %c0_i32 = arith.constant 0 : i32
    %c0_i32_0 = arith.constant 0 : i32
    return %arg0, %c0_i32 : i32, i32
  }
  func.func @transform_3(%arg0: i32) -> (i32, i32, i32) {
    %c0_i32 = arith.constant 0 : i32
    %c0_i32_0 = arith.constant 0 : i32
    %c0_i32_1 = arith.constant 0 : i32
    return %arg0, %c0_i32, %c0_i32_0 : i32, i32, i32
  }
}

</mosaic_0001>

<llo_original>
// kernel: tpu_custom_call.1
$region0: #{tpu_custom_call.1}
  #allocation0 [shape = 'u32[]', space=smem, size = 0x4, offset = 0x4, fixed_abs, tag = 'smem constant byte address 0x4 - core index']
  #allocation1 [shape = 'u32[72,128]{1,0:T(1,128)}', space=vmem, size = 0x9000, scoped, tag = 'internal scratch']
  %s0 = inlined_call_operand.hbm [shape: f32[32,592], index: 0, kind: input, shape index: {}]
  %s1 = inlined_call_operand.hbm [shape: f32[592,128], index: 1, kind: input, shape index: {}]
  %s2 = inlined_call_operand.hbm [shape: f32[32,128], index: 2, kind: output, shape index: {0}]
  %s3 = inlined_call_operand.hbm [shape: f32[2,2,128], index: 3, kind: output, shape index: {1}]
  %4 = xla_tuple %s2, %s3
  %s5 = sld [smem:[#allocation0]]
  $region57: #{tpu_custom_call.1} parent=0
    _
  %s7 = ssub.s32 1, %s5
  %s8 = scalar_select 0, %s7, %s5
  $region1: #{tpu_custom_call.1} parent=0
    #allocation2 [shape = 'u8[81920]{0}', space=vmem, size = 0x14000, scoped, tag = 'input window, operand 0']
    #allocation3 [shape = 's32[2]{0}', space=sflag, size = 0x8, scoped, tag = 'scoped memory for tpu_custom_call.1']
    #allocation4 [shape = 's32[2]{0}', space=sflag, size = 0x8, scoped, tag = 'scoped memory for tpu_custom_call.1']
    #allocation5 [shape = 'u8[303104]{0}', space=vmem, size = 0x4a000, scoped, tag = 'input window, operand 1, single buffered']
    #allocation6 [shape = 's32[1]{0}', space=sflag, size = 0x4, scoped, tag = 'scoped memory for tpu_custom_call.1']
    #allocation7 [shape = 'u8[16384]{0}', space=vmem, size = 0x4000, scoped, tag = 'output window, operand 0']
    #allocation8 [shape = 'u8[2048]{0}', space=vmem, size = 0x800, scoped, tag = 'output window, operand 1']
    #allocation9 [shape = 's32[2]{0}', space=sflag, size = 0x8, scoped, tag = 'scoped memory for tpu_custom_call.1']
    %9 = vsyncpa [#allocation3], 0
    %s10 = scalar_lea.sflag [#allocation3], 1
    %11 = vsyncpa %s10, 0
    %12 = vsyncpa [#allocation6], 0
    %13 = vsyncpa [#allocation4], 0
    %s14 = scalar_lea.sflag [#allocation4], 1
    %15 = vsyncpa %s14, 0
    %16 = vsyncpa [#allocation9], 0
    %s17 = scalar_lea.sflag [#allocation9], 1
    %18 = vsyncpa %s17, 0
    loop: start=0, step=1, limit=4
    $region2: #{tpu_custom_call.1} parent=1 // loop_pre_header
      _
    $region3: #{tpu_custom_call.1} parent=1 // loop_header
      %s20 = sphi 0, %s24
      %p21 = scmp.ge.s32.totalorder %s20, 4
      %s30 = sphi 0, %s32
      %s33 = sphi 0, %s30
      %s34 = sphi 0, %s33
      %s50 = sphi 0, %s34
      %s54 = sphi 0, %s54
      %s56 = sphi 0, %s54
      %s57 = sphi 0, %s56
      %s71 = sphi 0, %s57
      %s77 = sphi 0, %s79
      %s80 = sphi 0, %s77
      %s81 = sphi 0, %s80
      %s97 = sphi 0, %s81
      %s103 = sphi 0, %s105
      %s106 = sphi 0, %s103
      %s107 = sphi 0, %s106
      %s123 = sphi 0, %s107
    $region4: #{tpu_custom_call.1} parent=1 // loop_header_branch
      %23 = sbr.rel (%p21) target = $region8
    $region5: #{tpu_custom_call.1} parent=1 // loop_body
      %s25 = ssub.s32 %s20, 1
      %s26 = ssub.s32 %s20, 2
      %s27 = sadd.s32 %s20, 1
      %s28 = ssub.s32 %s20, %s27
      %p29 = scmp.eq.s32.totalorder %s28, 0
      %s31 = sadd.s32 %s30, 1
      %s32 = scalar_select %p29, %s30, %s31
      %p35 = pneg %p29
      %p36 = scmp.eq.s32.totalorder %s20, 1
      %p37 = por %p35, %p36
      %p38 = scmp.ne.s32.totalorder %s30, %s33
      %p39 = scmp.eq.s32.totalorder %s20, 0
      %p40 = por %p38, %p39
      %p41 = scmp.ne.s32.totalorder %s30, %s33
      %p42 = scmp.eq.s32.totalorder %s25, 1
      %p43 = por %p41, %p42
      %p44 = scmp.ne.s32.totalorder %s33, %s34
      %p45 = scmp.eq.s32.totalorder %s25, 0
      %p46 = por %p44, %p45
      %p47 = scmp.ne.s32.totalorder %s33, %s34
      %p48 = scmp.eq.s32.totalorder %s26, 1
      %p49 = por %p47, %p48
      %p51 = scmp.ne.s32.totalorder %s34, %s50
      %p52 = scmp.eq.s32.totalorder %s26, 0
      %p53 = por %p51, %p52
      %s55 = sadd.s32 %s54, 1
      %p58 = scmp.eq.s32.totalorder %s20, 1
      %p59 = scmp.ne.s32.totalorder %s54, %s56
      %p60 = scmp.eq.s32.totalorder %s20, 0
      %p61 = por %p59, %p60
      %p62 = scmp.ne.s32.totalorder %s54, %s56
      %p63 = scmp.eq.s32.totalorder %s25, 1
      %p64 = por %p62, %p63
      %p65 = scmp.ne.s32.totalorder %s56, %s57
      %p66 = scmp.eq.s32.totalorder %s25, 0
      %p67 = por %p65, %p66
      %p68 = scmp.ne.s32.totalorder %s56, %s57
      %p69 = scmp.eq.s32.totalorder %s26, 1
      %p70 = por %p68, %p69
      %p72 = scmp.ne.s32.totalorder %s57, %s71
      %p73 = scmp.eq.s32.totalorder %s26, 0
      %p74 = por %p72, %p73
      %s75 = ssub.s32 %s20, %s27
      %p76 = scmp.eq.s32.totalorder %s75, 0
      %s78 = sadd.s32 %s77, 1
      %s79 = scalar_select %p76, %s77, %s78
      %p82 = pneg %p76
      %p83 = scmp.eq.s32.totalorder %s20, 1
      %p84 = por %p82, %p83
      %p85 = scmp.ne.s32.totalorder %s77, %s80
      %p86 = scmp.eq.s32.totalorder %s20, 0
      %p87 = por %p85, %p86
      %p88 = scmp.ne.s32.totalorder %s77, %s80
      %p89 = scmp.eq.s32.totalorder %s25, 1
      %p90 = por %p88, %p89
      %p91 = scmp.ne.s32.totalorder %s80, %s81
      %p92 = scmp.eq.s32.totalorder %s25, 0
      %p93 = por %p91, %p92
      %p94 = scmp.ne.s32.totalorder %s80, %s81
      %p95 = scmp.eq.s32.totalorder %s26, 1
      %p96 = por %p94, %p95
      %p98 = scmp.ne.s32.totalorder %s81, %s97
      %p99 = scmp.eq.s32.totalorder %s26, 0
      %p100 = por %p98, %p99
      %s101 = ssub.s32 %s20, %s27
      %p102 = scmp.eq.s32.totalorder %s101, 0
      %s104 = sadd.s32 %s103, 1
      %s105 = scalar_select %p102, %s103, %s104
      %p108 = pneg %p102
      %p109 = scmp.eq.s32.totalorder %s20, 1
      %p110 = por %p108, %p109
      %p111 = scmp.ne.s32.totalorder %s103, %s106
      %p112 = scmp.eq.s32.totalorder %s20, 0
      %p113 = por %p111, %p112
      %p114 = scmp.ne.s32.totalorder %s103, %s106
      %p115 = scmp.eq.s32.totalorder %s25, 1
      %p116 = por %p114, %p115
      %p117 = scmp.ne.s32.totalorder %s106, %s107
      %p118 = scmp.eq.s32.totalorder %s25, 0
      %p119 = por %p117, %p118
      %p120 = scmp.ne.s32.totalorder %s106, %s107
      %p121 = scmp.eq.s32.totalorder %s26, 1
      %p122 = por %p120, %p121
      %p124 = scmp.ne.s32.totalorder %s107, %s123
      %p125 = scmp.eq.s32.totalorder %s26, 0
      %p126 = por %p124, %p125
      %p127 = scmp.le.s32.totalorder 1, %s20
      %p128 = scmp.lt.s32.totalorder %s20, 3
      %p129 = pnand %p127, %p128
      %p130 = pneg %p129
      // Predicated region
      $region9: #{tpu_custom_call.1} parent=5 // pred_check
        _
      $region10: #{tpu_custom_call.1} parent=5 // pred_check_branch
        %132 = sbr.rel (%p129) target = $region12
      $region11: #{tpu_custom_call.1} parent=5 // pred_region
        %s133 = ssub.s32 %s20, 1
        // Predicated region
        $region13: #{tpu_custom_call.1} parent=11 // pred_check
          %p134 = pneg %p67
        $region14: #{tpu_custom_call.1} parent=11 // pred_check_branch
          %136 = sbr.rel (%p134) target = $region16
        $region15: #{tpu_custom_call.1} parent=11 // pred_region
          %138 = vsyncadd [#allocation6], 0
          %s139 = sshll.u32 %s1, 4
          %s140 = int_to_ptr.hbm [resolvable:$true] %s139
          %s141 = sshll.u32 [#allocation5], 4
          %s142 = int_to_ptr.vmem [resolvable:$true] %s141
          %147 = dma.hbm_to_vmem [thread:$0]  %s140, 9472, %s142, [#allocation6], 128, 128, 8
        $region16: #{tpu_custom_call.1} parent=11 // pred_fallthru
          _
      $region12: #{tpu_custom_call.1} parent=5 // pred_fallthru
        _
      %p148 = scmp.lt.s32.totalorder %s20, 2
      // Predicated region
      $region17: #{tpu_custom_call.1} parent=5 // pred_check
        %p149 = pneg %p148
      $region18: #{tpu_custom_call.1} parent=5 // pred_check_branch
        %151 = sbr.rel (%p149) target = $region20
      $region19: #{tpu_custom_call.1} parent=5 // pred_region
        // Predicated region
        $region21: #{tpu_custom_call.1} parent=19 // pred_check
          %p152 = pneg %p40
        $region22: #{tpu_custom_call.1} parent=19 // pred_check_branch
          %154 = sbr.rel (%p152) target = $region24
        $region23: #{tpu_custom_call.1} parent=19 // pred_region
          %s155 = sand.u32 %s30, 1
          %s156 = scalar_lea.sflag [#allocation3], %s155
          %s157 = sand.u32 %s30, 1
          %s158 = smul.addr %s157, 80
          %s159 = scalar_lea.vmem [#allocation2], %s158
          %s160 = smul.u32 2, %s20
          %162 = vsyncadd %s156, 0
          %s163 = smul.addr %s160, 5
          %s164 = smul.addr %s163, 8
          %s165 = scalar_lea.hbm %s0, %s164
          %s166 = sshll.u32 %s165, 4
          %s167 = int_to_ptr.hbm [resolvable:$true] %s166
          %s168 = sshll.u32 %s159, 4
          %s169 = int_to_ptr.vmem [resolvable:$true] %s168
          %174 = dma.hbm_to_vmem [thread:$0]  %s167, 1280, %s169, %s156, 640, 640, 40
        $region24: #{tpu_custom_call.1} parent=19 // pred_fallthru
          _
      $region20: #{tpu_custom_call.1} parent=5 // pred_fallthru
        _
      %p175 = scmp.le.s32.totalorder 1, %s20
      %p176 = scmp.lt.s32.totalorder %s20, 3
      %p177 = pnand %p175, %p176
      %p178 = pneg %p177
      // Predicated region
      $region25: #{tpu_custom_call.1} parent=5 // pred_check
        _
      $region26: #{tpu_custom_call.1} parent=5 // pred_check_branch
        %180 = sbr.rel (%p177) target = $region28
      $region27: #{tpu_custom_call.1} parent=5 // pred_region
        %s181 = ssub.s32 %s20, 1
        %s182 = sand.u32 %s33, 1
        %s183 = scalar_lea.sflag [#allocation3], %s182
        %s184 = sand.u32 %s33, 1
        %s185 = smul.addr %s184, 80
        %s186 = scalar_lea.vmem [#allocation2], %s185
        // Predicated region
        $region29: #{tpu_custom_call.1} parent=27 // pred_check
          %p187 = pneg %p46
        $region30: #{tpu_custom_call.1} parent=27 // pred_check_branch
          %189 = sbr.rel (%p187) target = $region32
        $region31: #{tpu_custom_call.1} parent=27 // pred_region
          %191 = dma.done %s183, 1280
        $region32: #{tpu_custom_call.1} parent=27 // pred_fallthru
          _
        // Predicated region
        $region33: #{tpu_custom_call.1} parent=27 // pred_check
          %p192 = pneg %p67
        $region34: #{tpu_custom_call.1} parent=27 // pred_check_branch
          %194 = sbr.rel (%p192) target = $region36
        $region35: #{tpu_custom_call.1} parent=27 // pred_region
          %196 = dma.done [#allocation6], 9472
        $region36: #{tpu_custom_call.1} parent=27 // pred_fallthru
          _
        %s197 = sand.u32 %s33, 1
        %s198 = scalar_lea.sflag [#allocation3], %s197
        %s199 = sand.u32 %s33, 1
        %s200 = smul.addr %s199, 80
        %s201 = scalar_lea.vmem [#allocation2], %s200
        %p202 = pneg %p46
        %p203 = pneg %p43
        %p204 = pneg %p67
        %p205 = pneg %p64
        %p206 = pneg %p93
        %p207 = pneg %p90
        %s208 = sand.u32 %s80, 1
        %s209 = scalar_lea.sflag [#allocation4], %s208
        %s210 = sand.u32 %s80, 1
        %s211 = smul.addr %s210, 16
        %s212 = scalar_lea.vmem [#allocation7], %s211
        %p213 = pneg %p119
        %p214 = pneg %p116
        %s215 = sand.u32 %s106, 1
        %s216 = scalar_lea.sflag [#allocation9], %s215
        %s217 = sand.u32 %s106, 1
        %s218 = smul.addr %s217, 2
        %s219 = scalar_lea.vmem [#allocation8], %s218
        %s220 = smul.u32 2, %s25
        %s221 = smul.u32 2, %s25
        %v222 = vld [vmem:[%s186] sm:$0xff]
        %v223 = vld [vmem:[%s186 + $0x8] sm:$0xff]
        %v224 = vld [vmem:[%s186 + $0x10] sm:$0xff]
        %v225 = vld [vmem:[%s186 + $0x18] sm:$0xff]
        %v226 = vld [vmem:[%s186 + $0x20] sm:$0xff]
        %v227 = vld [vmem:[%s186 + $0x28] sm:$0xff]
        %v228 = vld [vmem:[%s186 + $0x30] sm:$0xff]
        %v229 = vld [vmem:[%s186 + $0x38] sm:$0xff]
        %v230 = vld [vmem:[%s186 + $0x40] sm:$0xff]
        %v231 = vld [vmem:[%s186 + $0x48] sm:$0xff]
        %v232 = vld [vmem:[#allocation5] sm:$0xff]
        %v233 = vld [vmem:[#allocation5 + $0x8] sm:$0xff]
        %v234 = vld [vmem:[#allocation5 + $0x10] sm:$0xff]
        %v235 = vld [vmem:[#allocation5 + $0x18] sm:$0xff]
        %v236 = vld [vmem:[#allocation5 + $0x20] sm:$0xff]
        %v237 = vld [vmem:[#allocation5 + $0x28] sm:$0xff]
        %v238 = vld [vmem:[#allocation5 + $0x30] sm:$0xff]
        %v239 = vld [vmem:[#allocation5 + $0x38] sm:$0xff]
        %v240 = vld [vmem:[#allocation5 + $0x40] sm:$0xff]
        %v241 = vld [vmem:[#allocation5 + $0x48] sm:$0xff]
        %v242 = vld [vmem:[#allocation5 + $0x50] sm:$0xff]
        %v243 = vld [vmem:[#allocation5 + $0x58] sm:$0xff]
        %v244 = vld [vmem:[#allocation5 + $0x60] sm:$0xff]
        %v245 = vld [vmem:[#allocation5 + $0x68] sm:$0xff]
        %v246 = vld [vmem:[#allocation5 + $0x70] sm:$0xff]
        %v247 = vld [vmem:[#allocation5 + $0x78] sm:$0xff]
        %v248 = vld [vmem:[#allocation5 + $0x80] sm:$0xff]
        %v249 = vld [vmem:[#allocation5 + $0x88] sm:$0xff]
        %v250 = vld [vmem:[#allocation5 + $0x90] sm:$0xff]
        %v251 = vld [vmem:[#allocation5 + $0x98] sm:$0xff]
        %v252 = vld [vmem:[#allocation5 + $0xa0] sm:$0xff]
        %v253 = vld [vmem:[#allocation5 + $0xa8] sm:$0xff]
        %v254 = vld [vmem:[#allocation5 + $0xb0] sm:$0xff]
        %v255 = vld [vmem:[#allocation5 + $0xb8] sm:$0xff]
        %v256 = vld [vmem:[#allocation5 + $0xc0] sm:$0xff]
        %v257 = vld [vmem:[#allocation5 + $0xc8] sm:$0xff]
        %v258 = vld [vmem:[#allocation5 + $0xd0] sm:$0xff]
        %v259 = vld [vmem:[#allocation5 + $0xd8] sm:$0xff]
        %v260 = vld [vmem:[#allocation5 + $0xe0] sm:$0xff]
        %v261 = vld [vmem:[#allocation5 + $0xe8] sm:$0xff]
        %v262 = vld [vmem:[#allocation5 + $0xf0] sm:$0xff]
        %v263 = vld [vmem:[#allocation5 + $0xf8] sm:$0xff]
        %v264 = vld [vmem:[#allocation5 + $0x100] sm:$0xff]
        %v265 = vld [vmem:[#allocation5 + $0x108] sm:$0xff]
        %v266 = vld [vmem:[#allocation5 + $0x110] sm:$0xff]
        %v267 = vld [vmem:[#allocation5 + $0x118] sm:$0xff]
        %v268 = vld [vmem:[#allocation5 + $0x120] sm:$0xff]
        %v269 = vld [vmem:[#allocation5 + $0x128] sm:$0xff]
        %v270 = vld [vmem:[#allocation5 + $0x130] sm:$0xff]
        %v271 = vld [vmem:[#allocation5 + $0x138] sm:$0xff]
        %v272 = vld [vmem:[#allocation5 + $0x140] sm:$0xff]
        %v273 = vld [vmem:[#allocation5 + $0x148] sm:$0xff]
        %v274 = vld [vmem:[#allocation5 + $0x150] sm:$0xff]
        %v275 = vld [vmem:[#allocation5 + $0x158] sm:$0xff]
        %v276 = vld [vmem:[#allocation5 + $0x160] sm:$0xff]
        %v277 = vld [vmem:[#allocation5 + $0x168] sm:$0xff]
        %v278 = vld [vmem:[#allocation5 + $0x170] sm:$0xff]
        %v279 = vld [vmem:[#allocation5 + $0x178] sm:$0xff]
        %v280 = vld [vmem:[#allocation5 + $0x180] sm:$0xff]
        %v281 = vld [vmem:[#allocation5 + $0x188] sm:$0xff]
        %v282 = vld [vmem:[#allocation5 + $0x190] sm:$0xff]
        %v283 = vld [vmem:[#allocation5 + $0x198] sm:$0xff]
        %v284 = vld [vmem:[#allocation5 + $0x1a0] sm:$0xff]
        %v285 = vld [vmem:[#allocation5 + $0x1a8] sm:$0xff]
        %v286 = vld [vmem:[#allocation5 + $0x1b0] sm:$0xff]
        %v287 = vld [vmem:[#allocation5 + $0x1b8] sm:$0xff]
        %v288 = vld [vmem:[#allocation5 + $0x1c0] sm:$0xff]
        %v289 = vld [vmem:[#allocation5 + $0x1c8] sm:$0xff]
        %v290 = vld [vmem:[#allocation5 + $0x1d0] sm:$0xff]
        %v291 = vld [vmem:[#allocation5 + $0x1d8] sm:$0xff]
        %v292 = vld [vmem:[#allocation5 + $0x1e0] sm:$0xff]
        %v293 = vld [vmem:[#allocation5 + $0x1e8] sm:$0xff]
        %v294 = vld [vmem:[#allocation5 + $0x1f0] sm:$0xff]
        %v295 = vld [vmem:[#allocation5 + $0x1f8] sm:$0xff]
        %v296 = vld [vmem:[#allocation5 + $0x200] sm:$0xff]
        %v297 = vld [vmem:[#allocation5 + $0x208] sm:$0xff]
        %v298 = vld [vmem:[#allocation5 + $0x210] sm:$0xff]
        %v299 = vld [vmem:[#allocation5 + $0x218] sm:$0xff]
        %v300 = vld [vmem:[#allocation5 + $0x220] sm:$0xff]
        %v301 = vld [vmem:[#allocation5 + $0x228] sm:$0xff]
        %v302 = vld [vmem:[#allocation5 + $0x230] sm:$0xff]
        %v303 = vld [vmem:[#allocation5 + $0x238] sm:$0xff]
        %v304 = vld [vmem:[#allocation5 + $0x240] sm:$0xff]
        %v305 = vld [vmem:[#allocation5 + $0x248] sm:$0xff]
        %vm306 = vcmask 654336
        %v308 = vsel %vm306, %v226, 0
        %v311 = vsel %vm306, %v231, 0
        %313 = vmatpush.msra.mxu0 %v247
        %314 = vmatpush.msra.mxu0 %v246
        %315 = vmatpush.msra.mxu0 %v245
        %316 = vmatpush.msra.mxu0 %v244
        %317 = vmatpush.msra.mxu0 %v243
        %318 = vmatpush.msra.mxu0 %v242
        %319 = vmatpush.msra.mxu0 %v241
        %320 = vmatpush.msra.mxu0 %v240
        %321 = vmatpush.msra.mxu0 %v239
        %322 = vmatpush.msra.mxu0 %v238
        %323 = vmatpush.msra.mxu0 %v237
        %324 = vmatpush.msra.mxu0 %v236
        %325 = vmatpush.msra.mxu0 %v235
        %326 = vmatpush.msra.mxu0 %v234
        %327 = vmatpush.msra.mxu0 %v233
        %328 = vmatpush.msra.mxu0 %v232
        %329 = vmatmul.f32.gmra.mxu0 %v222
        %v330 = vpop.f32.mrf.mxu0
        %v331 = vadd.f32 0.0, %v330
        %332 = vmatmul.f32.gmra.mxu0 %v227
        %v333 = vpop.f32.mrf.mxu0
        %v334 = vadd.f32 0.0, %v333
        %335 = vdwg.mxu0
        %336 = vmatpush.msra.mxu0 %v263
        %337 = vmatpush.msra.mxu0 %v262
        %338 = vmatpush.msra.mxu0 %v261
        %339 = vmatpush.msra.mxu0 %v260
        %340 = vmatpush.msra.mxu0 %v259
        %341 = vmatpush.msra.mxu0 %v258
        %342 = vmatpush.msra.mxu0 %v257
        %343 = vmatpush.msra.mxu0 %v256
        %344 = vmatpush.msra.mxu0 %v255
        %345 = vmatpush.msra.mxu0 %v254
        %346 = vmatpush.msra.mxu0 %v253
        %347 = vmatpush.msra.mxu0 %v252
        %348 = vmatpush.msra.mxu0 %v251
        %349 = vmatpush.msra.mxu0 %v250
        %350 = vmatpush.msra.mxu0 %v249
        %351 = vmatpush.msra.mxu0 %v248
        %352 = vmatmul.f32.gmra.mxu0 %v223
        %v353 = vpop.f32.mrf.mxu0
        %v354 = vadd.f32 %v331, %v353
        %355 = vmatmul.f32.gmra.mxu0 %v228
        %v356 = vpop.f32.mrf.mxu0
        %v357 = vadd.f32 %v334, %v356
        %358 = vdwg.mxu0
        %359 = vmatpush.msra.mxu0 %v279
        %360 = vmatpush.msra.mxu0 %v278
        %361 = vmatpush.msra.mxu0 %v277
        %362 = vmatpush.msra.mxu0 %v276
        %363 = vmatpush.msra.mxu0 %v275
        %364 = vmatpush.msra.mxu0 %v274
        %365 = vmatpush.msra.mxu0 %v273
        %366 = vmatpush.msra.mxu0 %v272
        %367 = vmatpush.msra.mxu0 %v271
        %368 = vmatpush.msra.mxu0 %v270
        %369 = vmatpush.msra.mxu0 %v269
        %370 = vmatpush.msra.mxu0 %v268
        %371 = vmatpush.msra.mxu0 %v267
        %372 = vmatpush.msra.mxu0 %v266
        %373 = vmatpush.msra.mxu0 %v265
        %374 = vmatpush.msra.mxu0 %v264
        %375 = vmatmul.f32.gmra.mxu0 %v224
        %v376 = vpop.f32.mrf.mxu0
        %v377 = vadd.f32 %v354, %v376
        %378 = vmatmul.f32.gmra.mxu0 %v229
        %v379 = vpop.f32.mrf.mxu0
        %v380 = vadd.f32 %v357, %v379
        %381 = vdwg.mxu0
        %382 = vmatpush.msra.mxu0 %v295
        %383 = vmatpush.msra.mxu0 %v294
        %384 = vmatpush.msra.mxu0 %v293
        %385 = vmatpush.msra.mxu0 %v292
        %386 = vmatpush.msra.mxu0 %v291
        %387 = vmatpush.msra.mxu0 %v290
        %388 = vmatpush.msra.mxu0 %v289
        %389 = vmatpush.msra.mxu0 %v288
        %390 = vmatpush.msra.mxu0 %v287
        %391 = vmatpush.msra.mxu0 %v286
        %392 = vmatpush.msra.mxu0 %v285
        %393 = vmatpush.msra.mxu0 %v284
        %394 = vmatpush.msra.mxu0 %v283
        %395 = vmatpush.msra.mxu0 %v282
        %396 = vmatpush.msra.mxu0 %v281
        %397 = vmatpush.msra.mxu0 %v280
        %398 = vmatmul.f32.gmra.mxu0 %v225
        %v399 = vpop.f32.mrf.mxu0
        %v400 = vadd.f32 %v377, %v399
        %401 = vmatmul.f32.gmra.mxu0 %v230
        %v402 = vpop.f32.mrf.mxu0
        %v403 = vadd.f32 %v380, %v402
        %404 = vdwg.mxu0
        %405 = vmatpush.msra.mxu0 0.0
        %406 = vmatpush.msra.mxu0 0.0
        %407 = vmatpush.msra.mxu0 0.0
        %408 = vmatpush.msra.mxu0 0.0
        %409 = vmatpush.msra.mxu0 0.0
        %410 = vmatpush.msra.mxu0 0.0
        %411 = vmatpush.msra.mxu0 %v305
        %412 = vmatpush.msra.mxu0 %v304
        %413 = vmatpush.msra.mxu0 %v303
        %414 = vmatpush.msra.mxu0 %v302
        %415 = vmatpush.msra.mxu0 %v301
        %416 = vmatpush.msra.mxu0 %v300
        %417 = vmatpush.msra.mxu0 %v299
        %418 = vmatpush.msra.mxu0 %v298
        %419 = vmatpush.msra.mxu0 %v297
        %420 = vmatpush.msra.mxu0 %v296
        %421 = vmatmul.f32.gmra.mxu0 %v308
        %v422 = vpop.f32.mrf.mxu0
        %v423 = vadd.f32 %v400, %v422
        %424 = vmatmul.f32.gmra.mxu0 %v311
        %v425 = vpop.f32.mrf.mxu0
        %v426 = vadd.f32 %v403, %v425
        %427 = vdwg.mxu0
        %v428 = vmax.f32 %v423, 0.0
        %v429 = vmax.f32 %v426, 0.0
        %430 = vst [vmem:[%s212] sm:$0xff] %v428
        %431 = vst [vmem:[%s212 + $0x8] sm:$0xff] %v429
        %v432 = vadd.f32 %v428, %v429
        %v433 = vrot.slane %v432, 4
        %v434 = vadd.f32 %v432, %v433
        %v435 = vrot.slane %v434, 2
        %v436 = vadd.f32 %v434, %v435
        %v437 = vrot.slane %v436, 1
        %v438 = vadd.f32 %v436, %v437
        %v439 = vmul.f32 %v428, %v428
        %v440 = vmul.f32 %v429, %v429
        %v441 = vadd.f32 %v439, %v440
        %v442 = vrot.slane %v441, 4
        %v443 = vadd.f32 %v441, %v442
        %v444 = vrot.slane %v443, 2
        %v445 = vadd.f32 %v443, %v444
        %v446 = vrot.slane %v445, 1
        %v447 = vadd.f32 %v445, %v446
        %vm448 = vcmask 1040384
        %v449 = vsel %vm448, %v438, %v447
        %450 = vst [vmem:[%s219] sm:$0x3] %v449
        %s451 = sand.u32 %s80, 1
        %s452 = scalar_lea.sflag [#allocation4], %s451
        %s453 = sand.u32 %s80, 1
        %s454 = smul.addr %s453, 16
        %s455 = scalar_lea.vmem [#allocation7], %s454
        %s456 = sand.u32 %s106, 1
        %s457 = scalar_lea.sflag [#allocation9], %s456
        %s458 = sand.u32 %s106, 1
        %s459 = smul.addr %s458, 2
        %s460 = scalar_lea.vmem [#allocation8], %s459
        // Predicated region
        $region37: #{tpu_custom_call.1} parent=27 // pred_check
          %p461 = pneg %p90
        $region38: #{tpu_custom_call.1} parent=27 // pred_check_branch
          %463 = sbr.rel (%p461) target = $region40
        $region39: #{tpu_custom_call.1} parent=27 // pred_region
          %s464 = smul.u32 2, %s25
          %466 = vsyncadd %s452, 0
          %s467 = smul.addr %s464, 8
          %s468 = scalar_lea.hbm %s2, %s467
          %s469 = sshll.u32 %s455, 4
          %s470 = int_to_ptr.vmem [resolvable:$true] %s469
          %s471 = sshll.u32 %s468, 4
          %s472 = int_to_ptr.hbm [resolvable:$true] %s471
          %477 = dma.vmem_to_hbm [thread:$0]  %s470, 256, %s472, %s452, 128, 128, 8
        $region40: #{tpu_custom_call.1} parent=27 // pred_fallthru
          _
        // Predicated region
        $region41: #{tpu_custom_call.1} parent=27 // pred_check
          %p478 = pneg %p116
        $region42: #{tpu_custom_call.1} parent=27 // pred_check_branch
          %480 = sbr.rel (%p478) target = $region44
        $region43: #{tpu_custom_call.1} parent=27 // pred_region
          %482 = vsyncadd %s457, 0
          %s483 = smul.addr %s25, 2
          %s484 = scalar_lea.hbm %s3, %s483
          %s486 = sshll.u32 %s460, 4
          %s487 = int_to_ptr.vmem [resolvable:$true] %s486
          %s488 = sshll.u32 %s484, 4
          %s489 = int_to_ptr.hbm [resolvable:$true] %s488
          %491 = dma.vmem_to_hbm [thread:$0]  %s487, 32, %s489, %s457
        $region44: #{tpu_custom_call.1} parent=27 // pred_fallthru
          _
      $region28: #{tpu_custom_call.1} parent=5 // pred_fallthru
        _
      %p492 = scmp.le.s32.totalorder 2, %s20
      // Predicated region
      $region45: #{tpu_custom_call.1} parent=5 // pred_check
        %p493 = pneg %p492
      $region46: #{tpu_custom_call.1} parent=5 // pred_check_branch
        %495 = sbr.rel (%p493) target = $region48
      $region47: #{tpu_custom_call.1} parent=5 // pred_region
        %s496 = ssub.s32 %s20, 2
        // Predicated region
        $region49: #{tpu_custom_call.1} parent=47 // pred_check
          %p497 = pneg %p96
        $region50: #{tpu_custom_call.1} parent=47 // pred_check_branch
          %499 = sbr.rel (%p497) target = $region52
        $region51: #{tpu_custom_call.1} parent=47 // pred_region
          %s500 = sand.u32 %s81, 1
          %s501 = scalar_lea.sflag [#allocation4], %s500
          %s502 = sand.u32 %s81, 1
          %s503 = smul.addr %s502, 16
          %s504 = scalar_lea.vmem [#allocation7], %s503
          %506 = dma.done %s501, 256
        $region52: #{tpu_custom_call.1} parent=47 // pred_fallthru
          _
        // Predicated region
        $region53: #{tpu_custom_call.1} parent=47 // pred_check
          %p507 = pneg %p122
        $region54: #{tpu_custom_call.1} parent=47 // pred_check_branch
          %509 = sbr.rel (%p507) target = $region56
        $region55: #{tpu_custom_call.1} parent=47 // pred_region
          %s510 = sand.u32 %s107, 1
          %s511 = scalar_lea.sflag [#allocation9], %s510
          %s512 = sand.u32 %s107, 1
          %s513 = smul.addr %s512, 2
          %s514 = scalar_lea.vmem [#allocation8], %s513
          %516 = dma.done %s511, 32
        $region56: #{tpu_custom_call.1} parent=47 // pred_fallthru
          _
      $region48: #{tpu_custom_call.1} parent=5 // pred_fallthru
        _
    $region6: #{tpu_custom_call.1} parent=1 // loop_footer
      %s24 = sadd.s32 1, %s20
    $region7: #{tpu_custom_call.1} parent=1 // loop_footer_branch
      %19 = sbr.rel target = $region3
    $region8: #{tpu_custom_call.1} parent=1 // loop_exit
      _
    %517 = vsyncpa [#allocation3], 1
    %s518 = scalar_lea.sflag [#allocation3], 1
    %519 = vsyncpa %s518, 1
    %520 = vsyncpa [#allocation6], 1
    %521 = vsyncpa [#allocation4], 1
    %s522 = scalar_lea.sflag [#allocation4], 1
    %523 = vsyncpa %s522, 1
    %524 = vsyncpa [#allocation9], 1
    %s525 = scalar_lea.sflag [#allocation9], 1
    %526 = vsyncpa %s525, 1

</llo_original>
